<compile_context>
chip_gen: v5e
topology: v5e:2x2
jax: 0.10.0
libtpu: 0.0.40
codegen_flags: <defaults>
</compile_context>

<pallas_src>
import functools

import jax
import jax.numpy as jnp
from jax import lax
from jax.experimental import pallas as pl
from jax.experimental.pallas import tpu as pltpu


def _dice_sums_kernel(logits_ref, target_ref, inter_ref, denom_ref, *,
                      tile_hw, hw_total, ignore_label):
    t_id = pl.program_id(1)
    last_t = pl.num_programs(1) - 1
    c = logits_ref.shape[0]

    # The (C, 1) output blocks stay resident in VMEM across the tile axis
    # (their block index only depends on the image index), so they double as
    # the accumulators: init at the first tile, auto write-back afterwards.
    @pl.when(t_id == 0)
    def _():
        inter_ref[...] = jnp.zeros_like(inter_ref)
        denom_ref[...] = jnp.zeros_like(denom_ref)

    def accumulate(valid):
        # valid: (1, tile_hw) bool lane mask, or None for a full tile.
        x = logits_ref[...].astype(jnp.float32)            # (C, tile_hw)
        x_max = jnp.max(x, axis=0, keepdims=True)          # (1, tile_hw)  XLU
        e = jnp.exp(x - x_max)                             # EUP
        inv = 1.0 / jnp.sum(e, axis=0, keepdims=True)      # exact recip, 1 row
        probs = e * inv                                     # (C, tile_hw)
        tgt = target_ref[...]                               # (1, tile_hw) int32
        cls = lax.broadcasted_iota(jnp.int32, (c, tile_hw), 0)
        hit = (tgt == cls) & (tgt != ignore_label)          # one-hot, ignore zeroed
        if valid is not None:
            probs = jnp.where(valid, probs, 0.0)            # padded lanes -> 0
            hit = hit & valid
        hit_f = hit.astype(jnp.float32)
        inter_ref[...] += jnp.sum(jnp.where(hit, probs, 0.0),
                                  axis=1, keepdims=True)
        denom_ref[...] += jnp.sum(probs + hit_f, axis=1, keepdims=True)

    if hw_total % tile_hw == 0:
        accumulate(None)                                    # never ragged
    else:
        @pl.when(t_id != last_t)
        def _():
            accumulate(None)                                # fast path, no mask

        @pl.when(t_id == last_t)
        def _():
            lane = lax.broadcasted_iota(jnp.int32, (1, tile_hw), 1)
            accumulate(t_id * tile_hw + lane < hw_total)


def _pick_tile_hw(hw, c, itemsize, requested):
    full = pl.cdiv(hw, 128) * 128
    if requested is not None:
        return min(max(128, (int(requested) // 128) * 128), full)
    # ~1 MiB of logits per grid step (>= 16 Ki lanes) amortizes the ~0.35 us
    # fixed per-step pipeline cost; cap so the double-buffered working set
    # stays well under v5e's 16 MiB default scoped-VMEM limit (and v7x's
    # 64 MiB physical VMEM).
    tile = max(16384, (1 << 20) // max(1, c * itemsize))
    tile = max(128, (tile // 128) * 128)
    vmem_budget = 10 << 20
    per_pixel = 2 * (c * itemsize + 4)      # 2x-buffered logits + int32 target
    cap = max(128, (vmem_budget // per_pixel) // 128 * 128)
    return min(tile, cap, full)


def dice_loss(output, target, *, ignore_label=-1, epsilon=1e-5, tile_hw=None):
    """output: (N, C, H, W) float logits; target: (N, h, w) int labels."""
    del epsilon  # Stored but unused in the PyTorch forward(); match that.
    n, c, ph, pw = output.shape
    _, h, w = target.shape
    if (ph, pw) != (h, w):
        # F.interpolate(mode='bilinear', align_corners=False) equivalent.
        # antialias=False matches PyTorch for both up- and down-scaling.
        # TODO(synk): fuse this upsample into the kernel as separable
        # interpolation matmuls on the low-res logits (MXU) to avoid
        # materializing and re-reading the full-res tensor from HBM.
        output = jax.image.resize(output, (n, c, h, w), method="bilinear",
                                  antialias=False)

    hw = h * w
    itemsize = jnp.dtype(output.dtype).itemsize
    tile = _pick_tile_hw(hw, c, itemsize, tile_hw)
    grid = (n, pl.cdiv(hw, tile))

    # Free reshapes: native channel-major layout, no transpose, no HBM padding
    # copy.  Logits keep their input dtype (bf16 stays bf16 on the wire).
    logits_nc = output.reshape(n, c, hw)
    target_n1 = target.reshape(n, 1, hw).astype(jnp.int32)

    kernel = functools.partial(_dice_sums_kernel, tile_hw=tile, hw_total=hw,
                               ignore_label=ignore_label)

    # NOTE: with C < 8 classes the (C, tile) f32 vregs use only C/8 of their
    # sublanes; acceptable because the kernel is HBM-bandwidth-bound.
    inter_n, denom_n = pl.pallas_call(
        kernel,
        out_shape=(
            jax.ShapeDtypeStruct((n, c, 1), jnp.float32),
            jax.ShapeDtypeStruct((n, c, 1), jnp.float32),
        ),
        grid_spec=pltpu.PrefetchScalarGridSpec(
            num_scalar_prefetch=0,
            grid=grid,
            in_specs=[
                pl.BlockSpec((pl.Squeezed(), c, tile),
                             lambda ni, ti: (ni, 0, ti)),
                pl.BlockSpec((pl.Squeezed(), 1, tile),
                             lambda ni, ti: (ni, 0, ti)),
            ],
            out_specs=[
                pl.BlockSpec((pl.Squeezed(), c, 1), lambda ni, ti: (ni, 0, 0)),
                pl.BlockSpec((pl.Squeezed(), c, 1), lambda ni, ti: (ni, 0, 0)),
            ],
        ),
        compiler_params=pltpu.CompilerParams(
            dimension_semantics=("parallel", "arbitrary")),
    )(logits_nc, target_n1)

    intersect = jnp.sum(inter_n[:, :, 0], axis=0)          # (C,)
    denominator = jnp.sum(denom_n[:, :, 0], axis=0)        # (C,)
    dice = jnp.mean(intersect / denominator)
    return 1.0 - dice


def _dice_loss_ref(output, target, *, ignore_label=-1):
    """Pure-JAX reference mirroring the PyTorch module (for validation)."""
    n, c, ph, pw = output.shape
    _, h, w = target.shape
    if (ph, pw) != (h, w):
        output = jax.image.resize(output, (n, c, h, w), method="bilinear",
                                  antialias=False)
    probs = jax.nn.softmax(output.astype(jnp.float32), axis=1)
    onehot = ((target[:, None, :, :] == jnp.arange(c)[None, :, None, None])
              & (target[:, None, :, :] != ignore_label)).astype(jnp.float32)
    intersect = jnp.sum(probs * onehot, axis=(0, 2, 3))
    denom = jnp.sum(probs + onehot, axis=(0, 2, 3))
    return 1.0 - jnp.mean(intersect / denom)


if __name__ == "__main__":
    key = jax.random.PRNGKey(0)
    k_logits, k_target, k_ignore = jax.random.split(key, 3)

    N, C, H, W = 2, 4, 16, 16
    output = jax.random.normal(k_logits, (N, C, H, W), dtype=jnp.float32)
    target = jax.random.randint(k_target, (N, H, W), 0, C, dtype=jnp.int32)
    # Sprinkle in some ignore_label (-1) pixels.
    ignore_mask = jax.random.bernoulli(k_ignore, 0.1, (N, H, W))
    target = jnp.where(ignore_mask, -1, target)

    loss = dice_loss(output, target, ignore_label=-1, epsilon=1e-5)
    jax.block_until_ready(loss)

    ref = _dice_loss_ref(output, target, ignore_label=-1)
    assert jnp.allclose(loss, ref, rtol=2e-4, atol=2e-4), (loss, ref)

    print("KERNEL_OK")
</pallas_src>

<mosaic_0001>
module attributes {stable_mosaic.version = 11 : i64} {
  func.func @_dice_sums_kernel(%arg0: i32, %arg1: i32, %arg2: memref<1x4x256xf32, #tpu.memory_space<vmem>>, %arg3: memref<1x1x256xi32, #tpu.memory_space<vmem>>, %arg4: memref<1x4x1xf32, #tpu.memory_space<vmem>>, %arg5: memref<1x4x1xf32, #tpu.memory_space<vmem>>) attributes {dimension_semantics = [#tpu.dimension_semantics<parallel>, #tpu.dimension_semantics<arbitrary>], iteration_bounds = array<i64: 2, 1>, scalar_prefetch = 0 : i64, scratch_operands = 0 : i64, tpu.core_type = #tpu.core_type<tc>, window_params = [{transform_indices = @transform_0, window_bounds = array<i64: 1, 4, 256>}, {transform_indices = @transform_1, window_bounds = array<i64: 1, 1, 256>}, {transform_indices = @transform_2, window_bounds = array<i64: 1, 4, 1>}, {transform_indices = @transform_3, window_bounds = array<i64: 1, 4, 1>}]} {
    %c0_i32 = arith.constant 0 : i32
    %0 = arith.cmpi eq, %arg1, %c0_i32 : i32
    %1 = arith.extui %0 : i1 to i32
    %c0_i32_0 = arith.constant 0 : i32
    %2 = arith.cmpi ne, %1, %c0_i32_0 : i32
    scf.if %2 {
      %cst_23 = arith.constant 0.000000e+00 : f32
      %46 = vector.broadcast %cst_23 : f32 to vector<4x1xf32>
      %c0_24 = arith.constant 0 : index
      %c0_25 = arith.constant 0 : index
      %c0_26 = arith.constant 0 : index
      %47 = vector.load %arg4[%c0_24, %c0_25, %c0_26] : memref<1x4x1xf32, #tpu.memory_space<vmem>>, vector<1x4x1xf32>
      %48 = vector.shape_cast %47 : vector<1x4x1xf32> to vector<4x1xf32>
      %49 = vector.shape_cast %46 : vector<4x1xf32> to vector<1x4x1xf32>
      tpu.vector_store %arg4[%c0_24, %c0_25, %c0_26], %49 {strides = array<i32>} : memref<1x4x1xf32, #tpu.memory_space<vmem>>, vector<1x4x1xf32>,
      %cst_27 = arith.constant 0.000000e+00 : f32
      %50 = vector.broadcast %cst_27 : f32 to vector<4x1xf32>
      %c0_28 = arith.constant 0 : index
      %c0_29 = arith.constant 0 : index
      %c0_30 = arith.constant 0 : index
      %51 = vector.load %arg5[%c0_28, %c0_29, %c0_30] : memref<1x4x1xf32, #tpu.memory_space<vmem>>, vector<1x4x1xf32>
      %52 = vector.shape_cast %51 : vector<1x4x1xf32> to vector<4x1xf32>
      %53 = vector.shape_cast %50 : vector<4x1xf32> to vector<1x4x1xf32>
      tpu.vector_store %arg5[%c0_28, %c0_29, %c0_30], %53 {strides = array<i32>} : memref<1x4x1xf32, #tpu.memory_space<vmem>>, vector<1x4x1xf32>,
    } else {
    }
    %c0 = arith.constant 0 : index
    %c0_1 = arith.constant 0 : index
    %c0_2 = arith.constant 0 : index
    %3 = vector.load %arg2[%c0, %c0_1, %c0_2] : memref<1x4x256xf32, #tpu.memory_space<vmem>>, vector<1x4x256xf32>
    %4 = vector.shape_cast %3 : vector<1x4x256xf32> to vector<4x256xf32>
    %cst = arith.constant dense<0xFF800000> : vector<256xf32>
    %5 = vector.multi_reduction <maximumf>, %4, %cst [0] : vector<4x256xf32> to vector<256xf32>
    %6 = vector.shape_cast %5 : vector<256xf32> to vector<1x256xf32>
    %7 = vector.broadcast %6 : vector<1x256xf32> to vector<4x256xf32>
    %8 = arith.subf %4, %7 : vector<4x256xf32>
    %9 = math.exp %8 : vector<4x256xf32>
    %cst_3 = arith.constant dense<0.000000e+00> : vector<256xf32>
    %10 = vector.multi_reduction <add>, %9, %cst_3 [0] : vector<4x256xf32> to vector<256xf32>
    %11 = vector.shape_cast %10 : vector<256xf32> to vector<1x256xf32>
    %cst_4 = arith.constant 1.000000e+00 : f32
    %12 = vector.broadcast %cst_4 : f32 to vector<1x256xf32>
    %13 = arith.divf %12, %11 : vector<1x256xf32>
    %14 = vector.broadcast %13 : vector<1x256xf32> to vector<4x256xf32>
    %15 = arith.mulf %9, %14 : vector<4x256xf32>
    %c0_5 = arith.constant 0 : index
    %c0_6 = arith.constant 0 : index
    %c0_7 = arith.constant 0 : index
    %16 = vector.load %arg3[%c0_5, %c0_6, %c0_7] : memref<1x1x256xi32, #tpu.memory_space<vmem>>, vector<1x1x256xi32>
    %17 = vector.shape_cast %16 : vector<1x1x256xi32> to vector<1x256xi32>
    %18 = tpu.iota {dimensions = array<i32: 0>} : vector<4x256xi32>
    %19 = vector.broadcast %17 : vector<1x256xi32> to vector<4x256xi32>
    %20 = arith.cmpi eq, %19, %18 : vector<4x256xi32>
    %c-1_i32 = arith.constant -1 : i32
    %21 = vector.broadcast %c-1_i32 : i32 to vector<1x256xi32>
    %22 = arith.cmpi ne, %17, %21 : vector<1x256xi32>
    %23 = vector.broadcast %22 : vector<1x256xi1> to vector<4x256xi1>
    %24 = arith.andi %20, %23 : vector<4x256xi1>
    %25 = arith.extui %24 : vector<4x256xi1> to vector<4x256xi32>
    %26 = arith.sitofp %25 : vector<4x256xi32> to vector<4x256xf32>
    %c0_8 = arith.constant 0 : index
    %c0_9 = arith.constant 0 : index
    %c0_10 = arith.constant 0 : index
    %27 = vector.load %arg4[%c0_8, %c0_9, %c0_10] : memref<1x4x1xf32, #tpu.memory_space<vmem>>, vector<1x4x1xf32>
    %28 = vector.shape_cast %27 : vector<1x4x1xf32> to vector<4x1xf32>
    %cst_11 = arith.constant 0.000000e+00 : f32
    %29 = vector.broadcast %cst_11 : f32 to vector<4x256xf32>
    %30 = arith.select %24, %15, %29 : vector<4x256xi1>, vector<4x256xf32>
    %cst_12 = arith.constant dense<0.000000e+00> : vector<4xf32>
    %31 = vector.multi_reduction <add>, %30, %cst_12 [1] : vector<4x256xf32> to vector<4xf32>
    %32 = vector.shape_cast %31 : vector<4xf32> to vector<4x1xf32>
    %33 = arith.addf %28, %32 : vector<4x1xf32>
    %c0_13 = arith.constant 0 : index
    %c0_14 = arith.constant 0 : index
    %c0_15 = arith.constant 0 : index
    %34 = vector.load %arg4[%c0_13, %c0_14, %c0_15] : memref<1x4x1xf32, #tpu.memory_space<vmem>>, vector<1x4x1xf32>
    %35 = vector.shape_cast %34 : vector<1x4x1xf32> to vector<4x1xf32>
    %36 = vector.shape_cast %33 : vector<4x1xf32> to vector<1x4x1xf32>
    tpu.vector_store %arg4[%c0_13, %c0_14, %c0_15], %36 {strides = array<i32>} : memref<1x4x1xf32, #tpu.memory_space<vmem>>, vector<1x4x1xf32>,
    %c0_16 = arith.constant 0 : index
    %c0_17 = arith.constant 0 : index
    %c0_18 = arith.constant 0 : index
    %37 = vector.load %arg5[%c0_16, %c0_17, %c0_18] : memref<1x4x1xf32, #tpu.memory_space<vmem>>, vector<1x4x1xf32>
    %38 = vector.shape_cast %37 : vector<1x4x1xf32> to vector<4x1xf32>
    %39 = arith.addf %15, %26 : vector<4x256xf32>
    %cst_19 = arith.constant dense<0.000000e+00> : vector<4xf32>
    %40 = vector.multi_reduction <add>, %39, %cst_19 [1] : vector<4x256xf32> to vector<4xf32>
    %41 = vector.shape_cast %40 : vector<4xf32> to vector<4x1xf32>
    %42 = arith.addf %38, %41 : vector<4x1xf32>
    %c0_20 = arith.constant 0 : index
    %c0_21 = arith.constant 0 : index
    %c0_22 = arith.constant 0 : index
    %43 = vector.load %arg5[%c0_20, %c0_21, %c0_22] : memref<1x4x1xf32, #tpu.memory_space<vmem>>, vector<1x4x1xf32>
    %44 = vector.shape_cast %43 : vector<1x4x1xf32> to vector<4x1xf32>
    %45 = vector.shape_cast %42 : vector<4x1xf32> to vector<1x4x1xf32>
    tpu.vector_store %arg5[%c0_20, %c0_21, %c0_22], %45 {strides = array<i32>} : memref<1x4x1xf32, #tpu.memory_space<vmem>>, vector<1x4x1xf32>,
    return
  }
  func.func @transform_0(%arg0: i32, %arg1: i32) -> (i32, i32, i32) {
    %c0_i32 = arith.constant 0 : i32
    %c0_i32_0 = arith.constant 0 : i32
    return %arg0, %c0_i32, %arg1 : i32, i32, i32
  }
  func.func @transform_1(%arg0: i32, %arg1: i32) -> (i32, i32, i32) {
    %c0_i32 = arith.constant 0 : i32
    %c0_i32_0 = arith.constant 0 : i32
    return %arg0, %c0_i32, %arg1 : i32, i32, i32
  }
  func.func @transform_2(%arg0: i32, %arg1: i32) -> (i32, i32, i32) {
    %c0_i32 = arith.constant 0 : i32
    %c0_i32_0 = arith.constant 0 : i32
    %c0_i32_1 = arith.constant 0 : i32
    return %arg0, %c0_i32, %c0_i32_0 : i32, i32, i32
  }
  func.func @transform_3(%arg0: i32, %arg1: i32) -> (i32, i32, i32) {
    %c0_i32 = arith.constant 0 : i32
    %c0_i32_0 = arith.constant 0 : i32
    %c0_i32_1 = arith.constant 0 : i32
    return %arg0, %c0_i32, %c0_i32_0 : i32, i32, i32
  }
}

</mosaic_0001>

<llo_original>
// kernel: tpu_custom_call.1
$region0: #{tpu_custom_call.1}
  #allocation0 [shape = 'u32[]', space=smem, size = 0x4, offset = 0x4, fixed_abs, tag = 'smem constant byte address 0x4 - core index']
  #allocation1 [shape = 'u32[72,128]{1,0:T(1,128)}', space=vmem, size = 0x9000, scoped, tag = 'internal scratch']
  %s0 = inlined_call_operand.hbm [shape: f32[2,4,256], index: 0, kind: input, shape index: {}]
  %s1 = inlined_call_operand.hbm [shape: s32[2,1,256], index: 1, kind: input, shape index: {}]
  %s2 = inlined_call_operand.vmem [shape: f32[2,4,1], index: 2, kind: output, shape index: {0}]
  %s3 = inlined_call_operand.vmem [shape: f32[2,4,1], index: 3, kind: output, shape index: {1}]
  %4 = xla_tuple %s2, %s3
  %s5 = sld [smem:[#allocation0]]
  $region61: #{tpu_custom_call.1} parent=0
    _
  %s7 = ssub.s32 1, %s5
  %s8 = scalar_select 0, %s7, %s5
  $region1: #{tpu_custom_call.1} parent=0
    #allocation2 [shape = 'u8[8192]{0}', space=vmem, size = 0x2000, scoped, tag = 'input window, operand 0']
    #allocation3 [shape = 's32[2]{0}', space=sflag, size = 0x8, scoped, tag = 'scoped memory for tpu_custom_call.1']
    #allocation4 [shape = 'u8[2048]{0}', space=vmem, size = 0x800, scoped, tag = 'input window, operand 1']
    #allocation5 [shape = 's32[2]{0}', space=sflag, size = 0x8, scoped, tag = 'scoped memory for tpu_custom_call.1']
    %9 = vsyncpa [#allocation3], 0
    %s10 = scalar_lea.sflag [#allocation3], 1
    %11 = vsyncpa %s10, 0
    %12 = vsyncpa [#allocation5], 0
    %s13 = scalar_lea.sflag [#allocation5], 1
    %14 = vsyncpa %s13, 0
    loop: start=0, step=1, limit=4
    $region2: #{tpu_custom_call.1} parent=1 // loop_pre_header
      _
    $region3: #{tpu_custom_call.1} parent=1 // loop_header
      %s16 = sphi 0, %s20
      %p17 = scmp.ge.s32.totalorder %s16, 4
      %s23 = sphi 0, %s35
      %s24 = sphi 0, %s31
      %s25 = sphi 0, %s23
      %s26 = sphi 0, %s24
      %s27 = sphi 0, %s25
      %s28 = sphi 0, %s26
      %s40 = sphi 0, %s42
      %s43 = sphi 0, %s40
      %s44 = sphi 0, %s43
      %s60 = sphi 0, %s44
      %s68 = sphi 0, %s70
      %s71 = sphi 0, %s68
      %s72 = sphi 0, %s71
      %s88 = sphi 0, %s72
      %s94 = sphi 0, %s96
      %s97 = sphi 0, %s94
      %s98 = sphi 0, %s97
      %s114 = sphi 0, %s98
      %s120 = sphi 0, %s122
      %s123 = sphi 0, %s120
      %s124 = sphi 0, %s123
      %s140 = sphi 0, %s124
    $region4: #{tpu_custom_call.1} parent=1 // loop_header_branch
      %19 = sbr.rel (%p17) target = $region8
    $region5: #{tpu_custom_call.1} parent=1 // loop_body
      %s21 = ssub.s32 %s16, 1
      %s22 = ssub.s32 %s16, 2
      %s29 = sadd.s32 1, %s24
      %p30 = scmp.ge.s32.totalorder %s29, 1
      %s31 = scalar_select %p30, 0, %s29
      %s32 = sadd.s32 1, %s23
      %s33 = scalar_select %p30, %s32, %s23
      %p34 = scmp.ge.s32.totalorder %s33, 2
      %s35 = scalar_select %p34, 0, %s33
      %s36 = ssub.s32 %s23, %s35
      %s37 = ssub.s32 %s24, %s31
      %s38 = sor.u32 %s36, %s37
      %p39 = scmp.eq.s32.totalorder %s38, 0
      %s41 = sadd.s32 %s40, 1
      %s42 = scalar_select %p39, %s40, %s41
      %p45 = pneg %p39
      %p46 = scmp.eq.s32.totalorder %s16, 1
      %p47 = por %p45, %p46
      %p48 = scmp.ne.s32.totalorder %s40, %s43
      %p49 = scmp.eq.s32.totalorder %s16, 0
      %p50 = por %p48, %p49
      %p51 = scmp.ne.s32.totalorder %s40, %s43
      %p52 = scmp.eq.s32.totalorder %s21, 1
      %p53 = por %p51, %p52
      %p54 = scmp.ne.s32.totalorder %s43, %s44
      %p55 = scmp.eq.s32.totalorder %s21, 0
      %p56 = por %p54, %p55
      %p57 = scmp.ne.s32.totalorder %s43, %s44
      %p58 = scmp.eq.s32.totalorder %s22, 1
      %p59 = por %p57, %p58
      %p61 = scmp.ne.s32.totalorder %s44, %s60
      %p62 = scmp.eq.s32.totalorder %s22, 0
      %p63 = por %p61, %p62
      %s64 = ssub.s32 %s23, %s35
      %s65 = ssub.s32 %s24, %s31
      %s66 = sor.u32 %s64, %s65
      %p67 = scmp.eq.s32.totalorder %s66, 0
      %s69 = sadd.s32 %s68, 1
      %s70 = scalar_select %p67, %s68, %s69
      %p73 = pneg %p67
      %p74 = scmp.eq.s32.totalorder %s16, 1
      %p75 = por %p73, %p74
      %p76 = scmp.ne.s32.totalorder %s68, %s71
      %p77 = scmp.eq.s32.totalorder %s16, 0
      %p78 = por %p76, %p77
      %p79 = scmp.ne.s32.totalorder %s68, %s71
      %p80 = scmp.eq.s32.totalorder %s21, 1
      %p81 = por %p79, %p80
      %p82 = scmp.ne.s32.totalorder %s71, %s72
      %p83 = scmp.eq.s32.totalorder %s21, 0
      %p84 = por %p82, %p83
      %p85 = scmp.ne.s32.totalorder %s71, %s72
      %p86 = scmp.eq.s32.totalorder %s22, 1
      %p87 = por %p85, %p86
      %p89 = scmp.ne.s32.totalorder %s72, %s88
      %p90 = scmp.eq.s32.totalorder %s22, 0
      %p91 = por %p89, %p90
      %s92 = ssub.s32 %s23, %s35
      %p93 = scmp.eq.s32.totalorder %s92, 0
      %s95 = sadd.s32 %s94, 1
      %s96 = scalar_select %p93, %s94, %s95
      %p99 = pneg %p93
      %p100 = scmp.eq.s32.totalorder %s16, 1
      %p101 = por %p99, %p100
      %p102 = scmp.ne.s32.totalorder %s94, %s97
      %p103 = scmp.eq.s32.totalorder %s16, 0
      %p104 = por %p102, %p103
      %p105 = scmp.ne.s32.totalorder %s94, %s97
      %p106 = scmp.eq.s32.totalorder %s21, 1
      %p107 = por %p105, %p106
      %p108 = scmp.ne.s32.totalorder %s97, %s98
      %p109 = scmp.eq.s32.totalorder %s21, 0
      %p110 = por %p108, %p109
      %p111 = scmp.ne.s32.totalorder %s97, %s98
      %p112 = scmp.eq.s32.totalorder %s22, 1
      %p113 = por %p111, %p112
      %p115 = scmp.ne.s32.totalorder %s98, %s114
      %p116 = scmp.eq.s32.totalorder %s22, 0
      %p117 = por %p115, %p116
      %s118 = ssub.s32 %s23, %s35
      %p119 = scmp.eq.s32.totalorder %s118, 0
      %s121 = sadd.s32 %s120, 1
      %s122 = scalar_select %p119, %s120, %s121
      %p125 = pneg %p119
      %p126 = scmp.eq.s32.totalorder %s16, 1
      %p127 = por %p125, %p126
      %p128 = scmp.ne.s32.totalorder %s120, %s123
      %p129 = scmp.eq.s32.totalorder %s16, 0
      %p130 = por %p128, %p129
      %p131 = scmp.ne.s32.totalorder %s120, %s123
      %p132 = scmp.eq.s32.totalorder %s21, 1
      %p133 = por %p131, %p132
      %p134 = scmp.ne.s32.totalorder %s123, %s124
      %p135 = scmp.eq.s32.totalorder %s21, 0
      %p136 = por %p134, %p135
      %p137 = scmp.ne.s32.totalorder %s123, %s124
      %p138 = scmp.eq.s32.totalorder %s22, 1
      %p139 = por %p137, %p138
      %p141 = scmp.ne.s32.totalorder %s124, %s140
      %p142 = scmp.eq.s32.totalorder %s22, 0
      %p143 = por %p141, %p142
      %p144 = scmp.le.s32.totalorder 1, %s16
      %p145 = scmp.lt.s32.totalorder %s16, 3
      %p146 = pnand %p144, %p145
      %p147 = pneg %p146
      // Predicated region
      $region9: #{tpu_custom_call.1} parent=5 // pred_check
        _
      $region10: #{tpu_custom_call.1} parent=5 // pred_check_branch
        %149 = sbr.rel (%p146) target = $region12
      $region11: #{tpu_custom_call.1} parent=5 // pred_region
        %s150 = ssub.s32 %s16, 1
      $region12: #{tpu_custom_call.1} parent=5 // pred_fallthru
        _
      %p151 = scmp.lt.s32.totalorder %s16, 2
      // Predicated region
      $region13: #{tpu_custom_call.1} parent=5 // pred_check
        %p152 = pneg %p151
      $region14: #{tpu_custom_call.1} parent=5 // pred_check_branch
        %154 = sbr.rel (%p152) target = $region16
      $region15: #{tpu_custom_call.1} parent=5 // pred_region
        // Predicated region
        $region17: #{tpu_custom_call.1} parent=15 // pred_check
          %p155 = pneg %p50
        $region18: #{tpu_custom_call.1} parent=15 // pred_check_branch
          %157 = sbr.rel (%p155) target = $region20
        $region19: #{tpu_custom_call.1} parent=15 // pred_region
          %s158 = sand.u32 %s40, 1
          %s159 = scalar_lea.sflag [#allocation3], %s158
          %s160 = sand.u32 %s40, 1
          %s161 = smul.addr %s160, 8
          %s162 = scalar_lea.vmem [#allocation2], %s161
          %s163 = smul.u32 2, %s24
          %165 = vsyncadd %s159, 0
          %s166 = smul.addr %s23, 2
          %s167 = sadd.s32 %s163, %s166
          %s168 = smul.addr %s167, 4
          %s169 = scalar_lea.hbm %s0, %s168
          %s171 = sshll.u32 %s169, 4
          %s172 = int_to_ptr.hbm [resolvable:$true] %s171
          %s173 = sshll.u32 %s162, 4
          %s174 = int_to_ptr.vmem [resolvable:$true] %s173
          %176 = dma.hbm_to_vmem [thread:$0]  %s172, 128, %s174, %s159
        $region20: #{tpu_custom_call.1} parent=15 // pred_fallthru
          _
        // Predicated region
        $region21: #{tpu_custom_call.1} parent=15 // pred_check
          %p177 = pneg %p78
        $region22: #{tpu_custom_call.1} parent=15 // pred_check_branch
          %179 = sbr.rel (%p177) target = $region24
        $region23: #{tpu_custom_call.1} parent=15 // pred_region
          %s180 = sand.u32 %s68, 1
          %s181 = scalar_lea.sflag [#allocation5], %s180
          %s182 = sand.u32 %s68, 1
          %s183 = smul.addr %s182, 2
          %s184 = scalar_lea.vmem [#allocation4], %s183
          %s185 = smul.u32 2, %s24
          %187 = vsyncadd %s181, 0
          %s188 = smul.addr %s23, 2
          %s189 = sadd.s32 %s185, %s188
          %s190 = scalar_lea.hbm %s1, %s189
          %s192 = sshll.u32 %s190, 4
          %s193 = int_to_ptr.hbm [resolvable:$true] %s192
          %s194 = sshll.u32 %s184, 4
          %s195 = int_to_ptr.vmem [resolvable:$true] %s194
          %197 = dma.hbm_to_vmem [thread:$0]  %s193, 32, %s195, %s181
        $region24: #{tpu_custom_call.1} parent=15 // pred_fallthru
          _
      $region16: #{tpu_custom_call.1} parent=5 // pred_fallthru
        _
      %p198 = scmp.le.s32.totalorder 1, %s16
      %p199 = scmp.lt.s32.totalorder %s16, 3
      %p200 = pnand %p198, %p199
      %p201 = pneg %p200
      // Predicated region
      $region25: #{tpu_custom_call.1} parent=5 // pred_check
        _
      $region26: #{tpu_custom_call.1} parent=5 // pred_check_branch
        %203 = sbr.rel (%p200) target = $region28
      $region27: #{tpu_custom_call.1} parent=5 // pred_region
        %s204 = ssub.s32 %s16, 1
        %s205 = sand.u32 %s43, 1
        %s206 = scalar_lea.sflag [#allocation3], %s205
        %s207 = sand.u32 %s43, 1
        %s208 = smul.addr %s207, 8
        %s209 = scalar_lea.vmem [#allocation2], %s208
        // Predicated region
        $region29: #{tpu_custom_call.1} parent=27 // pred_check
          %p210 = pneg %p56
        $region30: #{tpu_custom_call.1} parent=27 // pred_check_branch
          %212 = sbr.rel (%p210) target = $region32
        $region31: #{tpu_custom_call.1} parent=27 // pred_region
          %214 = dma.done %s206, 128
        $region32: #{tpu_custom_call.1} parent=27 // pred_fallthru
          _
        %s215 = sand.u32 %s71, 1
        %s216 = scalar_lea.sflag [#allocation5], %s215
        %s217 = sand.u32 %s71, 1
        %s218 = smul.addr %s217, 2
        %s219 = scalar_lea.vmem [#allocation4], %s218
        // Predicated region
        $region33: #{tpu_custom_call.1} parent=27 // pred_check
          %p220 = pneg %p84
        $region34: #{tpu_custom_call.1} parent=27 // pred_check_branch
          %222 = sbr.rel (%p220) target = $region36
        $region35: #{tpu_custom_call.1} parent=27 // pred_region
          %224 = dma.done %s216, 32
        $region36: #{tpu_custom_call.1} parent=27 // pred_fallthru
          _
        %s225 = sand.u32 %s43, 1
        %s226 = scalar_lea.sflag [#allocation3], %s225
        %s227 = sand.u32 %s43, 1
        %s228 = smul.addr %s227, 8
        %s229 = scalar_lea.vmem [#allocation2], %s228
        %p230 = pneg %p56
        %p231 = pneg %p53
        %s232 = sand.u32 %s71, 1
        %s233 = scalar_lea.sflag [#allocation5], %s232
        %s234 = sand.u32 %s71, 1
        %s235 = smul.addr %s234, 2
        %s236 = scalar_lea.vmem [#allocation4], %s235
        %p237 = pneg %p84
        %p238 = pneg %p81
        %p239 = pneg %p110
        %p240 = pneg %p107
        %p241 = scmp.lt.s32.totalorder %s25, 1
        %s242 = scalar_select %p241, %s25, 1
        %s243 = smul.addr %s242, 4
        %s244 = scalar_lea.vmem %s2, %s243
        %p245 = pneg %p136
        %p246 = pneg %p133
        %p247 = scmp.lt.s32.totalorder %s25, 1
        %s248 = scalar_select %p247, %s25, 1
        %s249 = smul.addr %s248, 4
        %s250 = scalar_lea.vmem %s3, %s249
        %s251 = smul.u32 2, %s26
        %s252 = smul.u32 2, %s26
        %p253 = scmp.lt.s32.totalorder %s25, 1
        %s254 = scalar_select %p253, %s25, 1
        %s255 = smul.addr %s254, 4
        %s256 = scalar_lea.vmem %s2, %s255
        %p257 = scmp.lt.s32.totalorder %s25, 1
        %s258 = scalar_select %p257, %s25, 1
        %s259 = smul.addr %s258, 4
        %s260 = scalar_lea.vmem %s3, %s259
        %p261 = scmp.eq.s32.totalorder %s26, 0
        // Predicated region
        $region37: #{tpu_custom_call.1} parent=27 // pred_check
          %p262 = pneg %p261
        $region38: #{tpu_custom_call.1} parent=27 // pred_check_branch
          %264 = sbr.rel (%p262) target = $region40
        $region39: #{tpu_custom_call.1} parent=27 // pred_region
          %vm265 = vcmask 3072
          %266 = vst.msk [vmem:[%s256] sm:$0xf] %vm265, 0.0
          %267 = vst.msk [vmem:[%s260] sm:$0xf] %vm265, 0.0
        $region40: #{tpu_custom_call.1} parent=27 // pred_fallthru
          _
        %v268 = vld [vmem:[%s209] sm:$0xff]
        %270 = vst [vmem:[#allocation1] ss:$2 sm:$0xff] %v268
        %v271 = vld.sshfl [vmem:[#allocation1] sm:$0xff pattern:$0x75316420]
        %v272 = vld.sshfl [vmem:[#allocation1 + $0x8] sm:$0xff pattern:$0x75316420]
        %vm275 = vcmask 1043456
        %v276 = vsel %vm275, %v271, -inf
        %v277 = vrot.slane %v276, 4
        %v278 = vmax.f32 %v276, %v277
        %v279 = vrot.slane %v278, 2
        %v280 = vmax.f32 %v278, %v279
        %v281 = vrot.slane %v280, 1
        %v282 = vmax.f32 %v280, %v281
        %v283 = vsel %vm275, %v272, -inf
        %v284 = vrot.slane %v283, 4
        %v285 = vmax.f32 %v283, %v284
        %v286 = vrot.slane %v285, 2
        %v287 = vmax.f32 %v285, %v286
        %v288 = vrot.slane %v287, 1
        %v289 = vmax.f32 %v287, %v288
        %v292 = vrot.slane %v289, 4
        %v293 = vsel %vm275, %v282, %v292
        %v295 = vsub.f32 %v268, %v293
        %v296 = vmul.f32 %v295, 1.442695
        %v297 = vpow.pop %v296
        %299 = vst [vmem:[#allocation1] ss:$2 sm:$0xff] %v297
        %v300 = vld.sshfl [vmem:[#allocation1] sm:$0xff pattern:$0x75316420]
        %v301 = vld.sshfl [vmem:[#allocation1 + $0x8] sm:$0xff pattern:$0x75316420]
        %v304 = vsel %vm275, %v300, 0.0
        %v305 = vrot.slane %v304, 4
        %v306 = vadd.f32 %v304, %v305
        %v307 = vrot.slane %v306, 2
        %v308 = vadd.f32 %v306, %v307
        %v309 = vrot.slane %v308, 1
        %v310 = vadd.f32 %v308, %v309
        %v311 = vsel %vm275, %v301, 0.0
        %v312 = vrot.slane %v311, 4
        %v313 = vadd.f32 %v311, %v312
        %v314 = vrot.slane %v313, 2
        %v315 = vadd.f32 %v313, %v314
        %v316 = vrot.slane %v315, 1
        %v317 = vadd.f32 %v315, %v316
        %v318 = vrcp.pop %v310
        %v319 = vmul.f32 %v310, %v318
        %v320 = vsub.f32 1.0, %v319
        %v321 = vmul.f32 %v318, %v320
        %v322 = vadd.f32 %v318, %v321
        %vm323 = vweird.f32 %v310
        %vm324 = vweird.f32 %v318
        %vm325 = vmor %vm323, %vm324
        %v326 = vsel %vm325, %v318, %v322
        %v327 = vand.u32 2147483647, %v310
        %vm328 = vcmp.eq.f32.partialorder %v327, 8.507059e+37
        %v329 = vand.u32 %v310, 2147483648
        %v330 = vor.u32 1.1754944e-38, %v329
        %v331 = vsel %vm328, %v330, %v326
        %v332 = vmul.f32 1.0, %v331
        %v333 = vrcp.pop %v317
        %v334 = vmul.f32 %v317, %v333
        %v335 = vsub.f32 1.0, %v334
        %v336 = vmul.f32 %v333, %v335
        %v337 = vadd.f32 %v333, %v336
        %vm338 = vweird.f32 %v317
        %vm339 = vweird.f32 %v333
        %vm340 = vmor %vm338, %vm339
        %v341 = vsel %vm340, %v333, %v337
        %v342 = vand.u32 2147483647, %v317
        %vm343 = vcmp.eq.f32.partialorder %v342, 8.507059e+37
        %v344 = vand.u32 %v317, 2147483648
        %v345 = vor.u32 1.1754944e-38, %v344
        %v346 = vsel %vm343, %v345, %v341
        %v347 = vmul.f32 1.0, %v346
        %v350 = vrot.slane %v347, 4
        %v351 = vsel %vm275, %v332, %v350
        %v353 = vmul.f32 %v297, %v351
        %v354 = vld [vmem:[%s219] sm:$0x3]
        %v355 = vlaneseq
        %v356 = vshrl.u32 %v355, 7
        %v357 = vperm.slane %v354, 0
        %v358 = vperm.slane %v354, 1
        %vm359 = vcmp.eq.s32.totalorder %v357, %v356
        %vm360 = vcmp.eq.s32.totalorder %v358, %v356
        %vm361 = vcmp.ne.s32.totalorder %v354, 4294967295
        %v362 = vsel %vm361, 1, 0
        %v363 = vperm.slane %v362, 0
        %v364 = vperm.slane %v362, 1
        %vm365 = vcmp.eq.s32.totalorder %v363, 1
        %vm366 = vcmp.eq.s32.totalorder %v364, 1
        %vm367 = vmand %vm359, %vm365
        %vm368 = vmand %vm360, %vm366
        %v369 = vsel %vm367, 1, 0
        %v370 = vsel %vm368, 1, 0
        %v371 = vcvt.s32.f32 %v369
        %v372 = vcvt.s32.f32 %v370
        %v373 = vld [vmem:[%s256] sm:$0xf]
        %375 = vst [vmem:[#allocation1] ss:$2 sm:$0xff] %v353
        %v376 = vld.sshfl [vmem:[#allocation1] sm:$0xff pattern:$0x75316420]
        %v377 = vld.sshfl [vmem:[#allocation1 + $0x8] sm:$0xff pattern:$0x75316420]
        %v380 = vsel %vm367, %v376, 0.0
        %v381 = vsel %vm368, %v377, 0.0
        %v382 = vsel %vm275, %v380, 0.0
        %v383 = vsel %vm275, %v381, 0.0
        %v384 = vadd.f32 %v382, %v383
        %385 = vadd.xlane.f32.xlu0 %v384
        %v386 = vpop.xlane.xlu0 %385
        %v387 = vadd.f32 %v373, %v386
        %vm388 = vcmask 3072
        %389 = vst.msk [vmem:[%s256] sm:$0xf] %vm388, %v387
        %v390 = vld [vmem:[%s260] sm:$0xf]
        %v393 = vrot.slane %v372, 4
        %v394 = vsel %vm275, %v371, %v393
        %v396 = vadd.f32 %v353, %v394
        %398 = vst [vmem:[#allocation1] ss:$2 sm:$0xff] %v396
        %v399 = vld.sshfl [vmem:[#allocation1] sm:$0xff pattern:$0x75316420]
        %v400 = vld.sshfl [vmem:[#allocation1 + $0x8] sm:$0xff pattern:$0x75316420]
        %v403 = vsel %vm275, %v399, 0.0
        %v404 = vsel %vm275, %v400, 0.0
        %v405 = vadd.f32 %v403, %v404
        %406 = vadd.xlane.f32.xlu0 %v405
        %v407 = vpop.xlane.xlu0 %406
        %v408 = vadd.f32 %v390, %v407
        %409 = vst.msk [vmem:[%s260] sm:$0xf] %vm388, %v408
        %p410 = scmp.lt.s32.totalorder %s25, 1
        %s411 = scalar_select %p410, %s25, 1
        %s412 = smul.addr %s411, 4
        %s413 = scalar_lea.vmem %s2, %s412
        %p414 = scmp.lt.s32.totalorder %s25, 1
        %s415 = scalar_select %p414, %s25, 1
        %s416 = smul.addr %s415, 4
        %s417 = scalar_lea.vmem %s3, %s416
        // Predicated region
        $region41: #{tpu_custom_call.1} parent=27 // pred_check
          %p418 = pneg %p107
        $region42: #{tpu_custom_call.1} parent=27 // pred_check_branch
          %420 = sbr.rel (%p418) target = $region44
        $region43: #{tpu_custom_call.1} parent=27 // pred_region
          _
        $region44: #{tpu_custom_call.1} parent=27 // pred_fallthru
          _
        // Predicated region
        $region45: #{tpu_custom_call.1} parent=27 // pred_check
          %p421 = pneg %p133
        $region46: #{tpu_custom_call.1} parent=27 // pred_check_branch
          %423 = sbr.rel (%p421) target = $region48
        $region47: #{tpu_custom_call.1} parent=27 // pred_region
          _
        $region48: #{tpu_custom_call.1} parent=27 // pred_fallthru
          _
      $region28: #{tpu_custom_call.1} parent=5 // pred_fallthru
        _
      %p424 = scmp.le.s32.totalorder 2, %s16
      // Predicated region
      $region49: #{tpu_custom_call.1} parent=5 // pred_check
        %p425 = pneg %p424
      $region50: #{tpu_custom_call.1} parent=5 // pred_check_branch
        %427 = sbr.rel (%p425) target = $region52
      $region51: #{tpu_custom_call.1} parent=5 // pred_region
        %s428 = ssub.s32 %s16, 2
        // Predicated region
        $region53: #{tpu_custom_call.1} parent=51 // pred_check
          %p429 = pneg %p113
        $region54: #{tpu_custom_call.1} parent=51 // pred_check_branch
          %431 = sbr.rel (%p429) target = $region56
        $region55: #{tpu_custom_call.1} parent=51 // pred_region
          %p432 = scmp.lt.s32.totalorder %s27, 1
          %s433 = scalar_select %p432, %s27, 1
          %s434 = smul.addr %s433, 4
          %s435 = scalar_lea.vmem %s2, %s434
        $region56: #{tpu_custom_call.1} parent=51 // pred_fallthru
          _
        // Predicated region
        $region57: #{tpu_custom_call.1} parent=51 // pred_check
          %p436 = pneg %p139
        $region58: #{tpu_custom_call.1} parent=51 // pred_check_branch
          %438 = sbr.rel (%p436) target = $region60
        $region59: #{tpu_custom_call.1} parent=51 // pred_region
          %p439 = scmp.lt.s32.totalorder %s27, 1
          %s440 = scalar_select %p439, %s27, 1
          %s441 = smul.addr %s440, 4
          %s442 = scalar_lea.vmem %s3, %s441
        $region60: #{tpu_custom_call.1} parent=51 // pred_fallthru
          _
      $region52: #{tpu_custom_call.1} parent=5 // pred_fallthru
        _
    $region6: #{tpu_custom_call.1} parent=1 // loop_footer
      %s20 = sadd.s32 1, %s16
    $region7: #{tpu_custom_call.1} parent=1 // loop_footer_branch
      %15 = sbr.rel target = $region3
    $region8: #{tpu_custom_call.1} parent=1 // loop_exit
      _
    %443 = vsyncpa [#allocation3], 1
    %s444 = scalar_lea.sflag [#allocation3], 1
    %445 = vsyncpa %s444, 1
    %446 = vsyncpa [#allocation5], 1
    %s447 = scalar_lea.sflag [#allocation5], 1
    %448 = vsyncpa %s447, 1

</llo_original>
